<compile_context>
chip_gen: v5e
topology: v5e:2x2
jax: 0.10.0
libtpu: 0.0.40
codegen_flags: <defaults>
</compile_context>

<pallas_src>
import functools

import numpy as np
import jax
import jax.numpy as jnp
from jax.experimental import pallas as pl
from jax.experimental.pallas import tpu as pltpu

LANE = 128          # lane width (last-dim alignment)
SUBLANE_BF16 = 16   # bf16 sublane packing (second-to-last dim alignment)


def _round_up(x, m):
    return (x + m - 1) // m * m


def _pad2d(a, rows, cols):
    r, c = a.shape
    return jnp.pad(a, ((0, rows - r), (0, cols - c)))


def _vmem_budget_bytes():
    """Generation-aware scoped-VMEM budget (~75% of physical)."""
    cap = None
    try:
        info = pltpu.get_tpu_info()
        cap = int(getattr(info, "vmem_capacity_bytes", 0)) or None
    except Exception:
        cap = None
    if not cap:
        cap = 64 * 1024 * 1024          # conservative fallback (v7x physical)
    return int(0.75 * cap)


# ------------------------------ Kernel bodies --------------------------------


def _classifier_mlp(emb_f32, extra_ref, cls_refs, o_ref, num_cls_layers,
                    has_extra):
    """Classifier MLP on a resident f32 embedding; writes padded logits."""
    h = emb_f32.astype(jnp.bfloat16)
    li = 0
    for layer in range(num_cls_layers):
        w_top = cls_refs[li]; li += 1
        acc = jnp.dot(h, w_top[...], preferred_element_type=jnp.float32)
        if layer == 0 and has_extra:
            # Folded concat: [emb, extra] @ W1 == emb @ W1_top + extra @ W1_bot
            w_bot = cls_refs[li]; li += 1
            acc = acc + jnp.dot(extra_ref[...], w_bot[...],
                                preferred_element_type=jnp.float32)
        b_ref = cls_refs[li]; li += 1
        acc = acc + b_ref[...].astype(jnp.float32)
        if layer < num_cls_layers - 1:
            acc = jnp.maximum(acc, 0.01 * acc)      # LeakyReLU (slope < 1)
            h = acc.astype(jnp.bfloat16)
        else:
            o_ref[...] = acc.astype(o_ref.dtype)


def _fused_kernel_fast(*args, num_cls_layers, has_extra):
    """Fast path: whole contraction resident in VMEM, no K grid, no scratch.

    args = x, w_bb, b_bb, [extra], per-layer (w_top, [w_bot], b), o_ref
    Grid: (num_batch_tiles,) — "parallel" (v7x megacore).
    """
    o_ref = args[-1]
    refs = args[:-1]
    x_ref, wbb_ref, bbb_ref = refs[0], refs[1], refs[2]
    pos = 3
    extra_ref = None
    if has_extra:
        extra_ref = refs[pos]; pos += 1
    cls_refs = refs[pos:]

    emb = jnp.dot(x_ref[...], wbb_ref[...], preferred_element_type=jnp.float32)
    # TODO(synk): torch.nn.GELU defaults to erf; tanh approx kept (synthetic backbone).
    emb = jax.nn.gelu(emb + bbb_ref[...].astype(jnp.float32))
    _classifier_mlp(emb, extra_ref, cls_refs, o_ref, num_cls_layers, has_extra)


def _fused_kernel_kstream(*args, num_cls_layers, has_extra):
    """Fallback for huge Din: K-streamed backbone contraction.

    Grid: (num_batch_tiles, num_k) — ("parallel", "arbitrary").
    """
    emb_acc = args[-1]          # f32 VMEM scratch [TB, Fp]
    o_ref = args[-2]            # f32 output      [TB, Cp]
    refs = args[:-2]
    x_ref, wbb_ref, bbb_ref = refs[0], refs[1], refs[2]
    pos = 3
    extra_ref = None
    if has_extra:
        extra_ref = refs[pos]; pos += 1
    cls_refs = refs[pos:]

    k = pl.program_id(1)
    nk = pl.num_programs(1)

    @pl.when(k == 0)
    def _init():
        emb_acc[...] = jnp.zeros_like(emb_acc)

    emb_acc[...] += jnp.dot(x_ref[...], wbb_ref[...],
                            preferred_element_type=jnp.float32)

    @pl.when(k == nk - 1)
    def _epilogue():
        emb = jax.nn.gelu(emb_acc[...] + bbb_ref[...].astype(jnp.float32))
        _classifier_mlp(emb, extra_ref, cls_refs, o_ref, num_cls_layers,
                        has_extra)


# --------------------------- Parameter creation ------------------------------


def make_params(key, in_features, feature_dim, extra_inputs, hidden_dims,
                num_classes):
    """torch.nn.Linear-style uniform init; unpadded f32 params."""
    keys = jax.random.split(key, 2 + len(hidden_dims))

    def init_linear(k, din, dout):
        kw, kb = jax.random.split(k)
        bound = 1.0 / float(np.sqrt(din))
        w = jax.random.uniform(kw, (din, dout), jnp.float32, -bound, bound)
        b = jax.random.uniform(kb, (dout,), jnp.float32, -bound, bound)
        return w, b

    params = {"backbone": init_linear(keys[0], in_features, feature_dim)}
    prev = feature_dim + (extra_inputs or 0)
    mlp = []
    for i, hd in enumerate(hidden_dims):
        mlp.append(init_linear(keys[1 + i], prev, hd))
        prev = hd
    mlp.append(init_linear(keys[-1], prev, num_classes))
    params["classifier"] = mlp
    return params


def pad_params(params, feature_dim, extra_dim):
    """Pad to 128-lane multiples, cast matmul weights to bf16, split W1."""
    wbb, bbb = params["backbone"]
    Din, F = wbb.shape
    Dinp = _round_up(Din, LANE)
    Fp = _round_up(F, LANE)
    has_extra = extra_dim is not None and extra_dim > 0
    Ep = _round_up(extra_dim, LANE) if has_extra else 0

    padded = {
        "wbb": _pad2d(wbb, Dinp, Fp).astype(jnp.bfloat16),
        "bbb": _pad2d(bbb[None, :], 1, Fp),                    # f32
    }
    cls = []
    prev_p = Fp
    for i, (w, b) in enumerate(params["classifier"]):
        dout = w.shape[1]
        doutp = _round_up(dout, LANE)
        if i == 0 and has_extra:
            entry = {
                "w_top": _pad2d(w[:feature_dim], Fp, doutp).astype(jnp.bfloat16),
                "w_bot": _pad2d(w[feature_dim:], Ep, doutp).astype(jnp.bfloat16),
                "b": _pad2d(b[None, :], 1, doutp),
            }
        else:
            entry = {
                "w_top": _pad2d(w, prev_p, doutp).astype(jnp.bfloat16),
                "b": _pad2d(b[None, :], 1, doutp),
            }
        cls.append(entry)
        prev_p = doutp
    padded["cls"] = cls
    padded["meta"] = dict(Din=Din, Dinp=Dinp, Fp=Fp, Ep=Ep, has_extra=has_extra,
                          num_classes=params["classifier"][-1][0].shape[1])
    return padded


# -------------------------------- Forward ------------------------------------


def _pick_tb(Bp):
    """Batch tile: single tile when small; multiple MXU-row-sized tiles when big."""
    if Bp <= 256:
        return Bp
    for tb in (256, 128, 64, 32, 16):
        if Bp % tb == 0:
            return tb
    return Bp


def _pick_tk(Dinp, TB, Fp, budget):
    """Largest K tile (multiple of LANE, dividing Dinp) whose double-buffered
    streamed blocks stay under ~half the scoped-VMEM budget."""
    best = LANE
    tk = LANE
    while tk <= Dinp:
        if Dinp % tk == 0:
            streamed = 2 * (TB * tk + tk * Fp) * 2     # bf16, 2 buffers
            if streamed <= budget // 2:
                best = tk
        tk += LANE
    return best


def forward(padded, x_nchw, extra=None):
    """Mirrors HugginFaceTupleWrapper.forward with one fused Pallas kernel."""
    meta = padded["meta"]
    Dinp, Fp, Ep = meta["Dinp"], meta["Fp"], meta["Ep"]
    has_extra = extra is not None
    assert has_extra == meta["has_extra"], \
        "params were built for a different extra-input configuration"

    B = x_nchw.shape[0]
    x = x_nchw.reshape(B, -1)
    Din = x.shape[1]
    assert Din == meta["Din"]
    Bp = _round_up(max(B, SUBLANE_BF16), SUBLANE_BF16)
    TB = _pick_tb(Bp)
    nb = Bp // TB

    # bf16 cast; pad only if actually needed (no extra HBM zero-copy when
    # Din is already lane aligned and the batch is already padded).
    x_bf = x.astype(jnp.bfloat16)
    if Bp != B or Dinp != Din:
        x_bf = jnp.pad(x_bf, ((0, Bp - B), (0, Dinp - Din)))

    inputs = [x_bf, padded["wbb"], padded["bbb"]]
    if has_extra:
        E = extra.shape[1]
        e_bf = extra.astype(jnp.bfloat16)
        if Bp != B or Ep != E:
            e_bf = jnp.pad(e_bf, ((0, Bp - B), (0, Ep - E)))
        inputs.append(e_bf)

    num_cls_layers = len(padded["cls"])
    cls_arrays = []
    for i, entry in enumerate(padded["cls"]):
        cls_arrays.append(entry["w_top"])
        if i == 0 and has_extra:
            cls_arrays.append(entry["w_bot"])
        cls_arrays.append(entry["b"])
    inputs += cls_arrays

    Cp = padded["cls"][-1]["w_top"].shape[1]
    budget = _vmem_budget_bytes()

    # Cost estimate (padded FLOPs / bytes) for the XLA scheduler.
    flops = 2 * Bp * Dinp * Fp
    for i, entry in enumerate(padded["cls"]):
        flops += 2 * Bp * entry["w_top"].shape[0] * entry["w_top"].shape[1]
        if i == 0 and has_extra:
            flops += 2 * Bp * Ep * entry["w_top"].shape[1]
    bytes_accessed = (sum(int(np.prod(a.shape)) * a.dtype.itemsize
                          for a in inputs) + Bp * Cp * 4)
    cost = pl.CostEstimate(flops=int(flops), transcendentals=int(Bp * Fp),
                           bytes_accessed=int(bytes_accessed))

    # VMEM accounting for the path decision (double-buffered blocks + f32
    # intermediates headroom).
    param_bytes = sum(int(np.prod(a.shape)) * a.dtype.itemsize
                      for a in inputs[1:])
    act_bytes = TB * Dinp * 2
    max_w = max([Fp, Cp] + [e["w_top"].shape[1] for e in padded["cls"]])
    inter_bytes = TB * Fp * 4 + 2 * TB * max_w * 4
    fast_bytes = 2 * (param_bytes + act_bytes + TB * Cp * 4) + inter_bytes
    use_fast = fast_bytes <= budget

    if use_fast:
        # ---------------- fast path: no K grid, no scratch ----------------
        in_specs = [pl.BlockSpec((TB, Dinp), lambda b: (b, 0)),
                    pl.BlockSpec((Dinp, Fp), lambda b: (0, 0)),
                    pl.BlockSpec((1, Fp), lambda b: (0, 0))]
        if has_extra:
            in_specs.append(pl.BlockSpec((TB, Ep), lambda b: (b, 0)))
        for a in cls_arrays:
            in_specs.append(pl.BlockSpec(a.shape, lambda b: (0, 0)))

        vmem_limit = int(min(max(fast_bytes, 4 * 1024 * 1024), budget))
        kernel = functools.partial(_fused_kernel_fast,
                                   num_cls_layers=num_cls_layers,
                                   has_extra=has_extra)
        out_p = pl.pallas_call(
            kernel,
            out_shape=jax.ShapeDtypeStruct((Bp, Cp), jnp.float32),
            grid=(nb,),
            in_specs=in_specs,
            out_specs=pl.BlockSpec((TB, Cp), lambda b: (b, 0)),
            compiler_params=pltpu.CompilerParams(
                dimension_semantics=("parallel",),     # v7x: 2 TCs when nb > 1
                vmem_limit_bytes=vmem_limit),
            cost_estimate=cost,
        )(*inputs)
    else:
        # ------------- fallback: K-streamed backbone contraction -------------
        tk = _pick_tk(Dinp, TB, Fp, budget)
        nk = Dinp // tk
        const = dict(pipeline_mode=pl.Buffered(1))   # residents: single buffer
        in_specs = [pl.BlockSpec((TB, tk), lambda b, k: (b, k)),
                    pl.BlockSpec((tk, Fp), lambda b, k: (k, 0)),
                    pl.BlockSpec((1, Fp), lambda b, k: (0, 0), **const)]
        if has_extra:
            in_specs.append(pl.BlockSpec((TB, Ep), lambda b, k: (b, 0)))
        for a in cls_arrays:
            in_specs.append(pl.BlockSpec(a.shape, lambda b, k: (0, 0), **const))

        streamed = 2 * (TB * tk + tk * Fp) * 2
        vmem_limit = int(min(max(streamed + param_bytes + 2 * TB * Cp * 4
                                 + TB * Fp * 4 + inter_bytes
                                 + (2 * TB * Ep * 2 if has_extra else 0),
                                 4 * 1024 * 1024), budget))
        kernel = functools.partial(_fused_kernel_kstream,
                                   num_cls_layers=num_cls_layers,
                                   has_extra=has_extra)
        out_p = pl.pallas_call(
            kernel,
            out_shape=jax.ShapeDtypeStruct((Bp, Cp), jnp.float32),
            grid_spec=pltpu.PrefetchScalarGridSpec(
                num_scalar_prefetch=0,
                grid=(nb, nk),
                in_specs=in_specs,
                out_specs=pl.BlockSpec((TB, Cp), lambda b, k: (b, 0)),
                scratch_shapes=[pltpu.VMEM((TB, Fp), jnp.float32)]),
            compiler_params=pltpu.CompilerParams(
                dimension_semantics=("parallel", "arbitrary"),
                vmem_limit_bytes=vmem_limit),
            cost_estimate=cost,
        )(*inputs)

    # Slice padded batch rows / padded class lanes outside the kernel.
    return out_p[:B, :meta["num_classes"]]


# ------------------------- Pure-JAX reference (check) -------------------------


def reference_forward(params, x_nchw, extra):
    hp = jax.lax.Precision.HIGHEST

    def bf(v):  # emulate the kernel's bf16 operand rounding
        return v.astype(jnp.bfloat16).astype(jnp.float32)

    B = x_nchw.shape[0]
    x = bf(x_nchw.reshape(B, -1))
    wbb, bbb = params["backbone"]
    h = jax.nn.gelu(jnp.dot(x, bf(wbb), precision=hp) + bbb)
    if extra is not None:
        h = jnp.concatenate([h, extra.astype(jnp.float32)], axis=1)
    n = len(params["classifier"])
    for i, (w, b) in enumerate(params["classifier"]):
        h = jnp.dot(bf(h), bf(w), precision=hp) + b
        if i < n - 1:
            h = jnp.where(h > 0, h, 0.01 * h)
    return h


# ----------------------------------- Main -------------------------------------


if __name__ == "__main__":
    key = jax.random.PRNGKey(0)
    k_x, k_e, k_p = jax.random.split(key, 3)

    # Small shapes consistent with the module's forward.
    B, C, H, W = 2, 4, 16, 16
    feature_dim = 32           # base model classifier.in_features
    extra_dim = 8              # extra_inputs
    hidden_dims = [64]         # classifier MLP hidden sizes
    num_classes = 10           # base model classifier.out_features

    x = jax.random.normal(k_x, (B, C, H, W), jnp.float32)
    extra = jax.random.normal(k_e, (B, extra_dim), jnp.float32)

    params = make_params(k_p, C * H * W, feature_dim, extra_dim, hidden_dims,
                         num_classes)
    padded = pad_params(params, feature_dim, extra_dim)

    logits = forward(padded, x, extra)
    jax.block_until_ready(logits)
    assert logits.shape == (B, num_classes), logits.shape

    ref = reference_forward(params, x, extra)
    max_err = float(jnp.max(jnp.abs(logits - ref)))
    assert jnp.allclose(logits, ref, rtol=5e-2, atol=5e-2), max_err

    print("KERNEL_OK")
</pallas_src>

<mosaic_0001>
module attributes {stable_mosaic.version = 11 : i64} {
  func.func @_fused_kernel_fast(%arg0: i32, %arg1: memref<16x1024xbf16, #tpu.memory_space<vmem>>, %arg2: memref<1024x128xbf16, #tpu.memory_space<vmem>>, %arg3: memref<1x128xf32, #tpu.memory_space<vmem>>, %arg4: memref<16x128xbf16, #tpu.memory_space<vmem>>, %arg5: memref<128x128xbf16, #tpu.memory_space<vmem>>, %arg6: memref<128x128xbf16, #tpu.memory_space<vmem>>, %arg7: memref<1x128xf32, #tpu.memory_space<vmem>>, %arg8: memref<128x128xbf16, #tpu.memory_space<vmem>>, %arg9: memref<1x128xf32, #tpu.memory_space<vmem>>, %arg10: memref<16x128xf32, #tpu.memory_space<vmem>>) attributes {dimension_semantics = [#tpu.dimension_semantics<parallel>], iteration_bounds = array<i64: 1>, scalar_prefetch = 0 : i64, scratch_operands = 0 : i64, tpu.core_type = #tpu.core_type<tc>, window_params = [{transform_indices = @transform_0, window_bounds = array<i64: 16, 1024>}, {pipeline_mode = #tpu.pipeline_mode<synchronous>, transform_indices = @transform_1, window_bounds = array<i64: 1024, 128>}, {pipeline_mode = #tpu.pipeline_mode<synchronous>, transform_indices = @transform_2, window_bounds = array<i64: 1, 128>}, {transform_indices = @transform_3, window_bounds = array<i64: 16, 128>}, {pipeline_mode = #tpu.pipeline_mode<synchronous>, transform_indices = @transform_4, window_bounds = array<i64: 128, 128>}, {pipeline_mode = #tpu.pipeline_mode<synchronous>, transform_indices = @transform_5, window_bounds = array<i64: 128, 128>}, {pipeline_mode = #tpu.pipeline_mode<synchronous>, transform_indices = @transform_6, window_bounds = array<i64: 1, 128>}, {pipeline_mode = #tpu.pipeline_mode<synchronous>, transform_indices = @transform_7, window_bounds = array<i64: 128, 128>}, {pipeline_mode = #tpu.pipeline_mode<synchronous>, transform_indices = @transform_8, window_bounds = array<i64: 1, 128>}, {transform_indices = @transform_9, window_bounds = array<i64: 16, 128>}]} {
    %c0 = arith.constant 0 : index
    %c0_0 = arith.constant 0 : index
    %0 = vector.load %arg1[%c0, %c0_0] : memref<16x1024xbf16, #tpu.memory_space<vmem>>, vector<16x1024xbf16>
    %c0_1 = arith.constant 0 : index
    %c0_2 = arith.constant 0 : index
    %1 = vector.load %arg2[%c0_1, %c0_2] : memref<1024x128xbf16, #tpu.memory_space<vmem>>, vector<1024x128xbf16>
    %cst = arith.constant dense<0.000000e+00> : vector<16x128xf32>
    %2 = tpu.matmul %0, %1, %cst {dimension_numbers = #tpu.dot_dimension_numbers<[1], [0], [0], [1], [0, 0, 1, 1], [], []>} : vector<16x1024xbf16>, vector<1024x128xbf16>, vector<16x128xf32> -> vector<16x128xf32>
    %c0_3 = arith.constant 0 : index
    %c0_4 = arith.constant 0 : index
    %3 = vector.load %arg3[%c0_3, %c0_4] : memref<1x128xf32, #tpu.memory_space<vmem>>, vector<1x128xf32>
    %4 = vector.broadcast %3 : vector<1x128xf32> to vector<16x128xf32>
    %5 = arith.addf %2, %4 : vector<16x128xf32>
    %6 = arith.mulf %5, %5 : vector<16x128xf32>
    %7 = arith.mulf %5, %6 : vector<16x128xf32>
    %cst_5 = arith.constant 4.471500e-02 : f32
    %8 = vector.broadcast %cst_5 : f32 to vector<16x128xf32>
    %9 = arith.mulf %8, %7 : vector<16x128xf32>
    %10 = arith.addf %5, %9 : vector<16x128xf32>
    %cst_6 = arith.constant 0.797884583 : f32
    %11 = vector.broadcast %cst_6 : f32 to vector<16x128xf32>
    %12 = arith.mulf %11, %10 : vector<16x128xf32>
    %13 = math.tanh %12 : vector<16x128xf32>
    %cst_7 = arith.constant 1.000000e+00 : f32
    %14 = vector.broadcast %cst_7 : f32 to vector<16x128xf32>
    %15 = arith.addf %14, %13 : vector<16x128xf32>
    %cst_8 = arith.constant 5.000000e-01 : f32
    %16 = vector.broadcast %cst_8 : f32 to vector<16x128xf32>
    %17 = arith.mulf %16, %15 : vector<16x128xf32>
    %18 = arith.mulf %5, %17 : vector<16x128xf32>
    %19 = arith.truncf %18 : vector<16x128xf32> to vector<16x128xbf16>
    %c0_9 = arith.constant 0 : index
    %c0_10 = arith.constant 0 : index
    %20 = vector.load %arg5[%c0_9, %c0_10] : memref<128x128xbf16, #tpu.memory_space<vmem>>, vector<128x128xbf16>
    %cst_11 = arith.constant dense<0.000000e+00> : vector<16x128xf32>
    %21 = tpu.matmul %19, %20, %cst_11 {dimension_numbers = #tpu.dot_dimension_numbers<[1], [0], [0], [1], [0, 0, 1, 1], [], []>} : vector<16x128xbf16>, vector<128x128xbf16>, vector<16x128xf32> -> vector<16x128xf32>
    %c0_12 = arith.constant 0 : index
    %c0_13 = arith.constant 0 : index
    %22 = vector.load %arg4[%c0_12, %c0_13] : memref<16x128xbf16, #tpu.memory_space<vmem>>, vector<16x128xbf16>
    %c0_14 = arith.constant 0 : index
    %c0_15 = arith.constant 0 : index
    %23 = vector.load %arg6[%c0_14, %c0_15] : memref<128x128xbf16, #tpu.memory_space<vmem>>, vector<128x128xbf16>
    %cst_16 = arith.constant dense<0.000000e+00> : vector<16x128xf32>
    %24 = tpu.matmul %22, %23, %cst_16 {dimension_numbers = #tpu.dot_dimension_numbers<[1], [0], [0], [1], [0, 0, 1, 1], [], []>} : vector<16x128xbf16>, vector<128x128xbf16>, vector<16x128xf32> -> vector<16x128xf32>
    %25 = arith.addf %21, %24 : vector<16x128xf32>
    %c0_17 = arith.constant 0 : index
    %c0_18 = arith.constant 0 : index
    %26 = vector.load %arg7[%c0_17, %c0_18] : memref<1x128xf32, #tpu.memory_space<vmem>>, vector<1x128xf32>
    %27 = vector.broadcast %26 : vector<1x128xf32> to vector<16x128xf32>
    %28 = arith.addf %25, %27 : vector<16x128xf32>
    %cst_19 = arith.constant 0.00999999977 : f32
    %29 = vector.broadcast %cst_19 : f32 to vector<16x128xf32>
    %30 = arith.mulf %29, %28 : vector<16x128xf32>
    %31 = arith.maximumf %28, %30 : vector<16x128xf32>
    %32 = arith.truncf %31 : vector<16x128xf32> to vector<16x128xbf16>
    %c0_20 = arith.constant 0 : index
    %c0_21 = arith.constant 0 : index
    %33 = vector.load %arg8[%c0_20, %c0_21] : memref<128x128xbf16, #tpu.memory_space<vmem>>, vector<128x128xbf16>
    %cst_22 = arith.constant dense<0.000000e+00> : vector<16x128xf32>
    %34 = tpu.matmul %32, %33, %cst_22 {dimension_numbers = #tpu.dot_dimension_numbers<[1], [0], [0], [1], [0, 0, 1, 1], [], []>} : vector<16x128xbf16>, vector<128x128xbf16>, vector<16x128xf32> -> vector<16x128xf32>
    %c0_23 = arith.constant 0 : index
    %c0_24 = arith.constant 0 : index
    %35 = vector.load %arg9[%c0_23, %c0_24] : memref<1x128xf32, #tpu.memory_space<vmem>>, vector<1x128xf32>
    %36 = vector.broadcast %35 : vector<1x128xf32> to vector<16x128xf32>
    %37 = arith.addf %34, %36 : vector<16x128xf32>
    %c0_25 = arith.constant 0 : index
    %c0_26 = arith.constant 0 : index
    %38 = vector.load %arg10[%c0_25, %c0_26] : memref<16x128xf32, #tpu.memory_space<vmem>>, vector<16x128xf32>
    tpu.vector_store %arg10[%c0_25, %c0_26], %37 {strides = array<i32>} : memref<16x128xf32, #tpu.memory_space<vmem>>, vector<16x128xf32>,
    return
  }
  func.func @transform_0(%arg0: i32) -> (i32, i32) {
    %c0_i32 = arith.constant 0 : i32
    %c0_i32_0 = arith.constant 0 : i32
    return %arg0, %c0_i32 : i32, i32
  }
  func.func @transform_1(%arg0: i32) -> (i32, i32) {
    %c0_i32 = arith.constant 0 : i32
    %c0_i32_0 = arith.constant 0 : i32
    %c0_i32_1 = arith.constant 0 : i32
    return %c0_i32, %c0_i32_0 : i32, i32
  }
  func.func @transform_2(%arg0: i32) -> (i32, i32) {
    %c0_i32 = arith.constant 0 : i32
    %c0_i32_0 = arith.constant 0 : i32
    %c0_i32_1 = arith.constant 0 : i32
    return %c0_i32, %c0_i32_0 : i32, i32
  }
  func.func @transform_3(%arg0: i32) -> (i32, i32) {
    %c0_i32 = arith.constant 0 : i32
    %c0_i32_0 = arith.constant 0 : i32
    return %arg0, %c0_i32 : i32, i32
  }
  func.func @transform_4(%arg0: i32) -> (i32, i32) {
    %c0_i32 = arith.constant 0 : i32
    %c0_i32_0 = arith.constant 0 : i32
    %c0_i32_1 = arith.constant 0 : i32
    return %c0_i32, %c0_i32_0 : i32, i32
  }
  func.func @transform_5(%arg0: i32) -> (i32, i32) {
    %c0_i32 = arith.constant 0 : i32
    %c0_i32_0 = arith.constant 0 : i32
    %c0_i32_1 = arith.constant 0 : i32
    return %c0_i32, %c0_i32_0 : i32, i32
  }
  func.func @transform_6(%arg0: i32) -> (i32, i32) {
    %c0_i32 = arith.constant 0 : i32
    %c0_i32_0 = arith.constant 0 : i32
    %c0_i32_1 = arith.constant 0 : i32
    return %c0_i32, %c0_i32_0 : i32, i32
  }
  func.func @transform_7(%arg0: i32) -> (i32, i32) {
    %c0_i32 = arith.constant 0 : i32
    %c0_i32_0 = arith.constant 0 : i32
    %c0_i32_1 = arith.constant 0 : i32
    return %c0_i32, %c0_i32_0 : i32, i32
  }
  func.func @transform_8(%arg0: i32) -> (i32, i32) {
    %c0_i32 = arith.constant 0 : i32
    %c0_i32_0 = arith.constant 0 : i32
    %c0_i32_1 = arith.constant 0 : i32
    return %c0_i32, %c0_i32_0 : i32, i32
  }
  func.func @transform_9(%arg0: i32) -> (i32, i32) {
    %c0_i32 = arith.constant 0 : i32
    %c0_i32_0 = arith.constant 0 : i32
    return %arg0, %c0_i32 : i32, i32
  }
}

</mosaic_0001>

<llo_original>
// kernel: tpu_custom_call.1
$region0: #{tpu_custom_call.1}
  #allocation0 [shape = 'u32[]', space=smem, size = 0x4, offset = 0x4, fixed_abs, tag = 'smem constant byte address 0x4 - core index']
  #allocation1 [shape = 'u32[72,128]{1,0:T(1,128)}', space=vmem, size = 0x9000, scoped, tag = 'internal scratch']
  %s0 = inlined_call_operand.hbm [shape: bf16[16,1024], index: 0, kind: input, shape index: {}]
  %s1 = inlined_call_operand.hbm [shape: bf16[1024,128], index: 1, kind: input, shape index: {}]
  %s2 = inlined_call_operand.vmem [shape: f32[1,128], index: 2, kind: input, shape index: {}]
  %s3 = inlined_call_operand.hbm [shape: bf16[16,128], index: 3, kind: input, shape index: {}]
  %s4 = inlined_call_operand.hbm [shape: bf16[128,128], index: 4, kind: input, shape index: {}]
  %s5 = inlined_call_operand.hbm [shape: bf16[128,128], index: 5, kind: input, shape index: {}]
  %s6 = inlined_call_operand.vmem [shape: f32[1,128], index: 6, kind: input, shape index: {}]
  %s7 = inlined_call_operand.hbm [shape: bf16[128,128], index: 7, kind: input, shape index: {}]
  %s8 = inlined_call_operand.vmem [shape: f32[1,128], index: 8, kind: input, shape index: {}]
  %s9 = inlined_call_operand.hbm [shape: f32[16,128], index: 9, kind: output, shape index: {}]
  %s10 = sld [smem:[#allocation0]]
  $region70: #{tpu_custom_call.1} parent=0
    _
  %s12 = ssub.s32 1, %s10
  %s13 = scalar_select 0, %s12, %s10
  $region1: #{tpu_custom_call.1} parent=0
    #allocation2 [shape = 'u8[32768]{0}', space=vmem, size = 0x8000, scoped, tag = 'input window, operand 0, single buffered']
    #allocation3 [shape = 's32[1]{0}', space=sflag, size = 0x4, scoped, tag = 'scoped memory for tpu_custom_call.1']
    #allocation4 [shape = 's32[1]{0}', space=sflag, size = 0x4, scoped, tag = 'scoped memory for tpu_custom_call.1']
    #allocation5 [shape = 'u8[262144]{0}', space=vmem, size = 0x40000, scoped, tag = 'input window, operand 1, single buffered']
    #allocation6 [shape = 's32[1]{0}', space=sflag, size = 0x4, scoped, tag = 'scoped memory for tpu_custom_call.1']
    #allocation7 [shape = 'u8[4096]{0}', space=vmem, size = 0x1000, scoped, tag = 'input window, operand 3, single buffered']
    #allocation8 [shape = 'u8[32768]{0}', space=vmem, size = 0x8000, scoped, tag = 'input window, operand 4, single buffered']
    #allocation9 [shape = 's32[1]{0}', space=sflag, size = 0x4, scoped, tag = 'scoped memory for tpu_custom_call.1']
    #allocation10 [shape = 'u8[32768]{0}', space=vmem, size = 0x8000, scoped, tag = 'input window, operand 5, single buffered']
    #allocation11 [shape = 'u8[32768]{0}', space=vmem, size = 0x8000, scoped, tag = 'input window, operand 7, single buffered']
    #allocation12 [shape = 's32[1]{0}', space=sflag, size = 0x4, scoped, tag = 'scoped memory for tpu_custom_call.1']
    #allocation13 [shape = 'u8[8192]{0}', space=vmem, size = 0x2000, scoped, tag = 'output window, operand 0, single buffered']
    %14 = vsyncpa [#allocation3], 0
    %15 = vsyncpa [#allocation6], 0
    %16 = vsyncpa [#allocation9], 0
    %17 = vsyncpa [#allocation12], 0
    %18 = vsyncpa [#allocation4], 0
    // Predicated region
    $region2: #{tpu_custom_call.1} parent=1 // pred_check
      _
    $region3: #{tpu_custom_call.1} parent=1 // pred_check_branch
      %20 = sbr.rel (0) target = $region5
    $region4: #{tpu_custom_call.1} parent=1 // pred_region
      %22 = vsyncadd [#allocation3], 0
      %s23 = sshll.u32 %s0, 4
      %s24 = int_to_ptr.hbm [resolvable:$true] %s23
      %s25 = sshll.u32 [#allocation2], 4
      %s26 = int_to_ptr.vmem [resolvable:$true] %s25
      %31 = dma.hbm_to_vmem [thread:$0]  %s24, 1024, %s26, [#allocation3], 512, 512, 32
    $region5: #{tpu_custom_call.1} parent=1 // pred_fallthru
      _
    // Predicated region
    $region6: #{tpu_custom_call.1} parent=1 // pred_check
      _
    $region7: #{tpu_custom_call.1} parent=1 // pred_check_branch
      %33 = sbr.rel (0) target = $region9
    $region8: #{tpu_custom_call.1} parent=1 // pred_region
      %35 = vsyncadd [#allocation6], 0
      %s36 = sshll.u32 %s1, 4
      %s37 = int_to_ptr.hbm [resolvable:$true] %s36
      %s38 = sshll.u32 [#allocation5], 4
      %s39 = int_to_ptr.vmem [resolvable:$true] %s38
      %44 = dma.hbm_to_vmem [thread:$0]  %s37, 8192, %s39, [#allocation6], 64, 64, 4
    $region9: #{tpu_custom_call.1} parent=1 // pred_fallthru
      _
    // Predicated region
    $region10: #{tpu_custom_call.1} parent=1 // pred_check
      _
    $region11: #{tpu_custom_call.1} parent=1 // pred_check_branch
      %46 = sbr.rel (0) target = $region13
    $region12: #{tpu_custom_call.1} parent=1 // pred_region
      _
    $region13: #{tpu_custom_call.1} parent=1 // pred_fallthru
      _
    // Predicated region
    $region14: #{tpu_custom_call.1} parent=1 // pred_check
      _
    $region15: #{tpu_custom_call.1} parent=1 // pred_check_branch
      %48 = sbr.rel (0) target = $region17
    $region16: #{tpu_custom_call.1} parent=1 // pred_region
      %50 = vsyncadd [#allocation6], 0
      %s51 = sshll.u32 %s3, 4
      %s52 = int_to_ptr.hbm [resolvable:$true] %s51
      %s53 = sshll.u32 [#allocation7], 4
      %s54 = int_to_ptr.vmem [resolvable:$true] %s53
      %59 = dma.hbm_to_vmem [thread:$0]  %s52, 128, %s54, [#allocation6], 64, 64, 4
    $region17: #{tpu_custom_call.1} parent=1 // pred_fallthru
      _
    // Predicated region
    $region18: #{tpu_custom_call.1} parent=1 // pred_check
      _
    $region19: #{tpu_custom_call.1} parent=1 // pred_check_branch
      %61 = sbr.rel (0) target = $region21
    $region20: #{tpu_custom_call.1} parent=1 // pred_region
      %63 = vsyncadd [#allocation9], 0
      %s64 = sshll.u32 %s4, 4
      %s65 = int_to_ptr.hbm [resolvable:$true] %s64
      %s66 = sshll.u32 [#allocation8], 4
      %s67 = int_to_ptr.vmem [resolvable:$true] %s66
      %72 = dma.hbm_to_vmem [thread:$0]  %s65, 1024, %s67, [#allocation9], 64, 64, 4
    $region21: #{tpu_custom_call.1} parent=1 // pred_fallthru
      _
    // Predicated region
    $region22: #{tpu_custom_call.1} parent=1 // pred_check
      _
    $region23: #{tpu_custom_call.1} parent=1 // pred_check_branch
      %74 = sbr.rel (0) target = $region25
    $region24: #{tpu_custom_call.1} parent=1 // pred_region
      %76 = vsyncadd [#allocation9], 0
      %s77 = sshll.u32 %s5, 4
      %s78 = int_to_ptr.hbm [resolvable:$true] %s77
      %s79 = sshll.u32 [#allocation10], 4
      %s80 = int_to_ptr.vmem [resolvable:$true] %s79
      %85 = dma.hbm_to_vmem [thread:$0]  %s78, 1024, %s80, [#allocation9], 64, 64, 4
    $region25: #{tpu_custom_call.1} parent=1 // pred_fallthru
      _
    // Predicated region
    $region26: #{tpu_custom_call.1} parent=1 // pred_check
      _
    $region27: #{tpu_custom_call.1} parent=1 // pred_check_branch
      %87 = sbr.rel (0) target = $region29
    $region28: #{tpu_custom_call.1} parent=1 // pred_region
      _
    $region29: #{tpu_custom_call.1} parent=1 // pred_fallthru
      _
    // Predicated region
    $region30: #{tpu_custom_call.1} parent=1 // pred_check
      _
    $region31: #{tpu_custom_call.1} parent=1 // pred_check_branch
      %89 = sbr.rel (0) target = $region33
    $region32: #{tpu_custom_call.1} parent=1 // pred_region
      %91 = vsyncadd [#allocation12], 0
      %s92 = sshll.u32 %s7, 4
      %s93 = int_to_ptr.hbm [resolvable:$true] %s92
      %s94 = sshll.u32 [#allocation11], 4
      %s95 = int_to_ptr.vmem [resolvable:$true] %s94
      %100 = dma.hbm_to_vmem [thread:$0]  %s93, 1024, %s95, [#allocation12], 64, 64, 4
    $region33: #{tpu_custom_call.1} parent=1 // pred_fallthru
      _
    // Predicated region
    $region34: #{tpu_custom_call.1} parent=1 // pred_check
      _
    $region35: #{tpu_custom_call.1} parent=1 // pred_check_branch
      %102 = sbr.rel (0) target = $region37
    $region36: #{tpu_custom_call.1} parent=1 // pred_region
      _
    $region37: #{tpu_custom_call.1} parent=1 // pred_fallthru
      _
    // Predicated region
    $region38: #{tpu_custom_call.1} parent=1 // pred_check
      _
    $region39: #{tpu_custom_call.1} parent=1 // pred_check_branch
      %104 = sbr.rel (0) target = $region41
    $region40: #{tpu_custom_call.1} parent=1 // pred_region
      %106 = dma.done [#allocation3], 1024
    $region41: #{tpu_custom_call.1} parent=1 // pred_fallthru
      _
    // Predicated region
    $region42: #{tpu_custom_call.1} parent=1 // pred_check
      _
    $region43: #{tpu_custom_call.1} parent=1 // pred_check_branch
      %108 = sbr.rel (0) target = $region45
    $region44: #{tpu_custom_call.1} parent=1 // pred_region
      %110 = dma.done [#allocation6], 8192
    $region45: #{tpu_custom_call.1} parent=1 // pred_fallthru
      _
    // Predicated region
    $region46: #{tpu_custom_call.1} parent=1 // pred_check
      _
    $region47: #{tpu_custom_call.1} parent=1 // pred_check_branch
      %112 = sbr.rel (0) target = $region49
    $region48: #{tpu_custom_call.1} parent=1 // pred_region
      %114 = dma.done [#allocation6], 128
    $region49: #{tpu_custom_call.1} parent=1 // pred_fallthru
      _
    // Predicated region
    $region50: #{tpu_custom_call.1} parent=1 // pred_check
      _
    $region51: #{tpu_custom_call.1} parent=1 // pred_check_branch
      %116 = sbr.rel (0) target = $region53
    $region52: #{tpu_custom_call.1} parent=1 // pred_region
      %118 = dma.done [#allocation9], 1024
    $region53: #{tpu_custom_call.1} parent=1 // pred_fallthru
      _
    // Predicated region
    $region54: #{tpu_custom_call.1} parent=1 // pred_check
      _
    $region55: #{tpu_custom_call.1} parent=1 // pred_check_branch
      %120 = sbr.rel (0) target = $region57
    $region56: #{tpu_custom_call.1} parent=1 // pred_region
      %122 = dma.done [#allocation9], 1024
    $region57: #{tpu_custom_call.1} parent=1 // pred_fallthru
      _
    // Predicated region
    $region58: #{tpu_custom_call.1} parent=1 // pred_check
      _
    $region59: #{tpu_custom_call.1} parent=1 // pred_check_branch
      %124 = sbr.rel (0) target = $region61
    $region60: #{tpu_custom_call.1} parent=1 // pred_region
      %126 = dma.done [#allocation12], 1024
    $region61: #{tpu_custom_call.1} parent=1 // pred_fallthru
      _
    %v127 = vld [vmem:[#allocation2] sm:$0xff]
    %v128 = vld [vmem:[#allocation2 + $0x8] sm:$0xff]
    %v129 = vld [vmem:[#allocation2 + $0x10] sm:$0xff]
    %v130 = vld [vmem:[#allocation2 + $0x18] sm:$0xff]
    %v131 = vld [vmem:[#allocation2 + $0x20] sm:$0xff]
    %v132 = vld [vmem:[#allocation2 + $0x28] sm:$0xff]
    %v133 = vld [vmem:[#allocation2 + $0x30] sm:$0xff]
    %v134 = vld [vmem:[#allocation2 + $0x38] sm:$0xff]
    %v135 = vld [vmem:[#allocation5] sm:$0xf]
    %v136 = vld [vmem:[#allocation5 + $0x4] sm:$0xf]
    %v137 = vld [vmem:[#allocation5 + $0x8] sm:$0xf]
    %v138 = vld [vmem:[#allocation5 + $0xc] sm:$0xf]
    %v139 = vld [vmem:[#allocation5 + $0x10] sm:$0xf]
    %v140 = vld [vmem:[#allocation5 + $0x14] sm:$0xf]
    %v141 = vld [vmem:[#allocation5 + $0x18] sm:$0xf]
    %v142 = vld [vmem:[#allocation5 + $0x1c] sm:$0xf]
    %v143 = vld [vmem:[#allocation5 + $0x20] sm:$0xf]
    %v144 = vld [vmem:[#allocation5 + $0x24] sm:$0xf]
    %v145 = vld [vmem:[#allocation5 + $0x28] sm:$0xf]
    %v146 = vld [vmem:[#allocation5 + $0x2c] sm:$0xf]
    %v147 = vld [vmem:[#allocation5 + $0x30] sm:$0xf]
    %v148 = vld [vmem:[#allocation5 + $0x34] sm:$0xf]
    %v149 = vld [vmem:[#allocation5 + $0x38] sm:$0xf]
    %v150 = vld [vmem:[#allocation5 + $0x3c] sm:$0xf]
    %v151 = vld [vmem:[#allocation5 + $0x40] sm:$0xf]
    %v152 = vld [vmem:[#allocation5 + $0x44] sm:$0xf]
    %v153 = vld [vmem:[#allocation5 + $0x48] sm:$0xf]
    %v154 = vld [vmem:[#allocation5 + $0x4c] sm:$0xf]
    %v155 = vld [vmem:[#allocation5 + $0x50] sm:$0xf]
    %v156 = vld [vmem:[#allocation5 + $0x54] sm:$0xf]
    %v157 = vld [vmem:[#allocation5 + $0x58] sm:$0xf]
    %v158 = vld [vmem:[#allocation5 + $0x5c] sm:$0xf]
    %v159 = vld [vmem:[#allocation5 + $0x60] sm:$0xf]
    %v160 = vld [vmem:[#allocation5 + $0x64] sm:$0xf]
    %v161 = vld [vmem:[#allocation5 + $0x68] sm:$0xf]
    %v162 = vld [vmem:[#allocation5 + $0x6c] sm:$0xf]
    %v163 = vld [vmem:[#allocation5 + $0x70] sm:$0xf]
    %v164 = vld [vmem:[#allocation5 + $0x74] sm:$0xf]
    %v165 = vld [vmem:[#allocation5 + $0x78] sm:$0xf]
    %v166 = vld [vmem:[#allocation5 + $0x7c] sm:$0xf]
    %v167 = vld [vmem:[#allocation5 + $0x80] sm:$0xf]
    %v168 = vld [vmem:[#allocation5 + $0x84] sm:$0xf]
    %v169 = vld [vmem:[#allocation5 + $0x88] sm:$0xf]
    %v170 = vld [vmem:[#allocation5 + $0x8c] sm:$0xf]
    %v171 = vld [vmem:[#allocation5 + $0x90] sm:$0xf]
    %v172 = vld [vmem:[#allocation5 + $0x94] sm:$0xf]
    %v173 = vld [vmem:[#allocation5 + $0x98] sm:$0xf]
    %v174 = vld [vmem:[#allocation5 + $0x9c] sm:$0xf]
    %v175 = vld [vmem:[#allocation5 + $0xa0] sm:$0xf]
    %v176 = vld [vmem:[#allocation5 + $0xa4] sm:$0xf]
    %v177 = vld [vmem:[#allocation5 + $0xa8] sm:$0xf]
    %v178 = vld [vmem:[#allocation5 + $0xac] sm:$0xf]
    %v179 = vld [vmem:[#allocation5 + $0xb0] sm:$0xf]
    %v180 = vld [vmem:[#allocation5 + $0xb4] sm:$0xf]
    %v181 = vld [vmem:[#allocation5 + $0xb8] sm:$0xf]
    %v182 = vld [vmem:[#allocation5 + $0xbc] sm:$0xf]
    %v183 = vld [vmem:[#allocation5 + $0xc0] sm:$0xf]
    %v184 = vld [vmem:[#allocation5 + $0xc4] sm:$0xf]
    %v185 = vld [vmem:[#allocation5 + $0xc8] sm:$0xf]
    %v186 = vld [vmem:[#allocation5 + $0xcc] sm:$0xf]
    %v187 = vld [vmem:[#allocation5 + $0xd0] sm:$0xf]
    %v188 = vld [vmem:[#allocation5 + $0xd4] sm:$0xf]
    %v189 = vld [vmem:[#allocation5 + $0xd8] sm:$0xf]
    %v190 = vld [vmem:[#allocation5 + $0xdc] sm:$0xf]
    %v191 = vld [vmem:[#allocation5 + $0xe0] sm:$0xf]
    %v192 = vld [vmem:[#allocation5 + $0xe4] sm:$0xf]
    %v193 = vld [vmem:[#allocation5 + $0xe8] sm:$0xf]
    %v194 = vld [vmem:[#allocation5 + $0xec] sm:$0xf]
    %v195 = vld [vmem:[#allocation5 + $0xf0] sm:$0xf]
    %v196 = vld [vmem:[#allocation5 + $0xf4] sm:$0xf]
    %v197 = vld [vmem:[#allocation5 + $0xf8] sm:$0xf]
    %v198 = vld [vmem:[#allocation5 + $0xfc] sm:$0xf]
    %v199 = vld [vmem:[#allocation5 + $0x100] sm:$0xf]
    %v200 = vld [vmem:[#allocation5 + $0x104] sm:$0xf]
    %v201 = vld [vmem:[#allocation5 + $0x108] sm:$0xf]
    %v202 = vld [vmem:[#allocation5 + $0x10c] sm:$0xf]
    %v203 = vld [vmem:[#allocation5 + $0x110] sm:$0xf]
    %v204 = vld [vmem:[#allocation5 + $0x114] sm:$0xf]
    %v205 = vld [vmem:[#allocation5 + $0x118] sm:$0xf]
    %v206 = vld [vmem:[#allocation5 + $0x11c] sm:$0xf]
    %v207 = vld [vmem:[#allocation5 + $0x120] sm:$0xf]
    %v208 = vld [vmem:[#allocation5 + $0x124] sm:$0xf]
    %v209 = vld [vmem:[#allocation5 + $0x128] sm:$0xf]
    %v210 = vld [vmem:[#allocation5 + $0x12c] sm:$0xf]
    %v211 = vld [vmem:[#allocation5 + $0x130] sm:$0xf]
    %v212 = vld [vmem:[#allocation5 + $0x134] sm:$0xf]
    %v213 = vld [vmem:[#allocation5 + $0x138] sm:$0xf]
    %v214 = vld [vmem:[#allocation5 + $0x13c] sm:$0xf]
    %v215 = vld [vmem:[#allocation5 + $0x140] sm:$0xf]
    %v216 = vld [vmem:[#allocation5 + $0x144] sm:$0xf]
    %v217 = vld [vmem:[#allocation5 + $0x148] sm:$0xf]
    %v218 = vld [vmem:[#allocation5 + $0x14c] sm:$0xf]
    %v219 = vld [vmem:[#allocation5 + $0x150] sm:$0xf]
    %v220 = vld [vmem:[#allocation5 + $0x154] sm:$0xf]
    %v221 = vld [vmem:[#allocation5 + $0x158] sm:$0xf]
    %v222 = vld [vmem:[#allocation5 + $0x15c] sm:$0xf]
    %v223 = vld [vmem:[#allocation5 + $0x160] sm:$0xf]
    %v224 = vld [vmem:[#allocation5 + $0x164] sm:$0xf]
    %v225 = vld [vmem:[#allocation5 + $0x168] sm:$0xf]
    %v226 = vld [vmem:[#allocation5 + $0x16c] sm:$0xf]
    %v227 = vld [vmem:[#allocation5 + $0x170] sm:$0xf]
    %v228 = vld [vmem:[#allocation5 + $0x174] sm:$0xf]
    %v229 = vld [vmem:[#allocation5 + $0x178] sm:$0xf]
    %v230 = vld [vmem:[#allocation5 + $0x17c] sm:$0xf]
    %v231 = vld [vmem:[#allocation5 + $0x180] sm:$0xf]
    %v232 = vld [vmem:[#allocation5 + $0x184] sm:$0xf]
    %v233 = vld [vmem:[#allocation5 + $0x188] sm:$0xf]
    %v234 = vld [vmem:[#allocation5 + $0x18c] sm:$0xf]
    %v235 = vld [vmem:[#allocation5 + $0x190] sm:$0xf]
    %v236 = vld [vmem:[#allocation5 + $0x194] sm:$0xf]
    %v237 = vld [vmem:[#allocation5 + $0x198] sm:$0xf]
    %v238 = vld [vmem:[#allocation5 + $0x19c] sm:$0xf]
    %v239 = vld [vmem:[#allocation5 + $0x1a0] sm:$0xf]
    %v240 = vld [vmem:[#allocation5 + $0x1a4] sm:$0xf]
    %v241 = vld [vmem:[#allocation5 + $0x1a8] sm:$0xf]
    %v242 = vld [vmem:[#allocation5 + $0x1ac] sm:$0xf]
    %v243 = vld [vmem:[#allocation5 + $0x1b0] sm:$0xf]
    %v244 = vld [vmem:[#allocation5 + $0x1b4] sm:$0xf]
    %v245 = vld [vmem:[#allocation5 + $0x1b8] sm:$0xf]
    %v246 = vld [vmem:[#allocation5 + $0x1bc] sm:$0xf]
    %v247 = vld [vmem:[#allocation5 + $0x1c0] sm:$0xf]
    %v248 = vld [vmem:[#allocation5 + $0x1c4] sm:$0xf]
    %v249 = vld [vmem:[#allocation5 + $0x1c8] sm:$0xf]
    %v250 = vld [vmem:[#allocation5 + $0x1cc] sm:$0xf]
    %v251 = vld [vmem:[#allocation5 + $0x1d0] sm:$0xf]
    %v252 = vld [vmem:[#allocation5 + $0x1d4] sm:$0xf]
    %v253 = vld [vmem:[#allocation5 + $0x1d8] sm:$0xf]
    %v254 = vld [vmem:[#allocation5 + $0x1dc] sm:$0xf]
    %v255 = vld [vmem:[#allocation5 + $0x1e0] sm:$0xf]
    %v256 = vld [vmem:[#allocation5 + $0x1e4] sm:$0xf]
    %v257 = vld [vmem:[#allocation5 + $0x1e8] sm:$0xf]
    %v258 = vld [vmem:[#allocation5 + $0x1ec] sm:$0xf]
    %v259 = vld [vmem:[#allocation5 + $0x1f0] sm:$0xf]
    %v260 = vld [vmem:[#allocation5 + $0x1f4] sm:$0xf]
    %v261 = vld [vmem:[#allocation5 + $0x1f8] sm:$0xf]
    %v262 = vld [vmem:[#allocation5 + $0x1fc] sm:$0xf]
    %v263 = vld [vmem:[%s2] sm:$0x1]
    %v265 = vperm.slane %v263, 0
    %v275 = vunpack.c.l.b16 %v127
    %v276 = vunpack.c.h.b16 %v127
    %v277 = vunpack.c.l.b16 %v128
    %v278 = vunpack.c.h.b16 %v128
    %v279 = vunpack.c.l.b16 %v129
    %v280 = vunpack.c.h.b16 %v129
    %v281 = vunpack.c.l.b16 %v130
    %v282 = vunpack.c.h.b16 %v130
    %v283 = vunpack.c.l.b16 %v131
    %v284 = vunpack.c.h.b16 %v131
    %v285 = vunpack.c.l.b16 %v132
    %v286 = vunpack.c.h.b16 %v132
    %v287 = vunpack.c.l.b16 %v133
    %v288 = vunpack.c.h.b16 %v133
    %v289 = vunpack.c.l.b16 %v134
    %v290 = vunpack.c.h.b16 %v134
    %v291 = vpack.c.b16 %v283, %v275
    %v292 = vpack.c.b16 %v284, %v276
    %v293 = vpack.c.b16 %v285, %v277
    %v294 = vpack.c.b16 %v286, %v278
    %v295 = vpack.c.b16 %v287, %v279
    %v296 = vpack.c.b16 %v288, %v280
    %v297 = vpack.c.b16 %v289, %v281
    %v298 = vpack.c.b16 %v290, %v282
    %v435 = vunpack.c.l.b16 %v135
    %v436 = vunpack.c.l.b16 %v136
    %v437 = vunpack.c.l.b16 %v137
    %v438 = vunpack.c.l.b16 %v138
    %v439 = vunpack.c.l.b16 %v139
    %v440 = vunpack.c.l.b16 %v140
    %v441 = vunpack.c.l.b16 %v141
    %v442 = vunpack.c.l.b16 %v142
    %v443 = vunpack.c.l.b16 %v143
    %v444 = vunpack.c.l.b16 %v144
    %v445 = vunpack.c.l.b16 %v145
    %v446 = vunpack.c.l.b16 %v146
    %v447 = vunpack.c.l.b16 %v147
    %v448 = vunpack.c.l.b16 %v148
    %v449 = vunpack.c.l.b16 %v149
    %v450 = vunpack.c.l.b16 %v150
    %v451 = vunpack.c.l.b16 %v151
    %v452 = vunpack.c.l.b16 %v152
    %v453 = vunpack.c.l.b16 %v153
    %v454 = vunpack.c.l.b16 %v154
    %v455 = vunpack.c.l.b16 %v155
    %v456 = vunpack.c.l.b16 %v156
    %v457 = vunpack.c.l.b16 %v157
    %v458 = vunpack.c.l.b16 %v158
    %v459 = vunpack.c.l.b16 %v159
    %v460 = vunpack.c.l.b16 %v160
    %v461 = vunpack.c.l.b16 %v161
    %v462 = vunpack.c.l.b16 %v162
    %v463 = vunpack.c.l.b16 %v163
    %v464 = vunpack.c.l.b16 %v164
    %v465 = vunpack.c.l.b16 %v165
    %v466 = vunpack.c.l.b16 %v166
    %v467 = vunpack.c.l.b16 %v167
    %v468 = vunpack.c.l.b16 %v168
    %v469 = vunpack.c.l.b16 %v169
    %v470 = vunpack.c.l.b16 %v170
    %v471 = vunpack.c.l.b16 %v171
    %v472 = vunpack.c.l.b16 %v172
    %v473 = vunpack.c.l.b16 %v173
    %v474 = vunpack.c.l.b16 %v174
    %v475 = vunpack.c.l.b16 %v175
    %v476 = vunpack.c.l.b16 %v176
    %v477 = vunpack.c.l.b16 %v177
    %v478 = vunpack.c.l.b16 %v178
    %v479 = vunpack.c.l.b16 %v179
    %v480 = vunpack.c.l.b16 %v180
    %v481 = vunpack.c.l.b16 %v181
    %v482 = vunpack.c.l.b16 %v182
    %v483 = vunpack.c.l.b16 %v183
    %v484 = vunpack.c.l.b16 %v184
    %v485 = vunpack.c.l.b16 %v185
    %v486 = vunpack.c.l.b16 %v186
    %v487 = vunpack.c.l.b16 %v187
    %v488 = vunpack.c.l.b16 %v188
    %v489 = vunpack.c.l.b16 %v189
    %v490 = vunpack.c.l.b16 %v190
    %v491 = vunpack.c.l.b16 %v191
    %v492 = vunpack.c.l.b16 %v192
    %v493 = vunpack.c.l.b16 %v193
    %v494 = vunpack.c.l.b16 %v194
    %v495 = vunpack.c.l.b16 %v195
    %v496 = vunpack.c.l.b16 %v196
    %v497 = vunpack.c.l.b16 %v197
    %v498 = vunpack.c.l.b16 %v198
    %v499 = vunpack.c.l.b16 %v199
    %v500 = vunpack.c.l.b16 %v200
    %v501 = vunpack.c.l.b16 %v201
    %v502 = vunpack.c.l.b16 %v202
    %v503 = vunpack.c.l.b16 %v203
    %v504 = vunpack.c.l.b16 %v204
    %v505 = vunpack.c.l.b16 %v205
    %v506 = vunpack.c.l.b16 %v206
    %v507 = vunpack.c.l.b16 %v207
    %v508 = vunpack.c.l.b16 %v208
    %v509 = vunpack.c.l.b16 %v209
    %v510 = vunpack.c.l.b16 %v210
    %v511 = vunpack.c.l.b16 %v211
    %v512 = vunpack.c.l.b16 %v212
    %v513 = vunpack.c.l.b16 %v213
    %v514 = vunpack.c.l.b16 %v214
    %v515 = vunpack.c.l.b16 %v215
    %v516 = vunpack.c.l.b16 %v216
    %v517 = vunpack.c.l.b16 %v217
    %v518 = vunpack.c.l.b16 %v218
    %v519 = vunpack.c.l.b16 %v219
    %v520 = vunpack.c.l.b16 %v220
    %v521 = vunpack.c.l.b16 %v221
    %v522 = vunpack.c.l.b16 %v222
    %v523 = vunpack.c.l.b16 %v223
    %v524 = vunpack.c.l.b16 %v224
    %v525 = vunpack.c.l.b16 %v225
    %v526 = vunpack.c.l.b16 %v226
    %v527 = vunpack.c.l.b16 %v227
    %v528 = vunpack.c.l.b16 %v228
    %v529 = vunpack.c.l.b16 %v229
    %v530 = vunpack.c.l.b16 %v230
    %v531 = vunpack.c.l.b16 %v231
    %v532 = vunpack.c.l.b16 %v232
    %v533 = vunpack.c.l.b16 %v233
    %v534 = vunpack.c.l.b16 %v234
    %v535 = vunpack.c.l.b16 %v235
    %v536 = vunpack.c.l.b16 %v236
    %v537 = vunpack.c.l.b16 %v237
    %v538 = vunpack.c.l.b16 %v238
    %v539 = vunpack.c.l.b16 %v239
    %v540 = vunpack.c.l.b16 %v240
    %v541 = vunpack.c.l.b16 %v241
    %v542 = vunpack.c.l.b16 %v242
    %v543 = vunpack.c.l.b16 %v243
    %v544 = vunpack.c.l.b16 %v244
    %v545 = vunpack.c.l.b16 %v245
    %v546 = vunpack.c.l.b16 %v246
    %v547 = vunpack.c.l.b16 %v247
    %v548 = vunpack.c.l.b16 %v248
    %v549 = vunpack.c.l.b16 %v249
    %v550 = vunpack.c.l.b16 %v250
    %v551 = vunpack.c.l.b16 %v251
    %v552 = vunpack.c.l.b16 %v252
    %v553 = vunpack.c.l.b16 %v253
    %v554 = vunpack.c.l.b16 %v254
    %v555 = vunpack.c.l.b16 %v255
    %v556 = vunpack.c.l.b16 %v256
    %v557 = vunpack.c.l.b16 %v257
    %v558 = vunpack.c.l.b16 %v258
    %v559 = vunpack.c.l.b16 %v259
    %v560 = vunpack.c.l.b16 %v260
    %v561 = vunpack.c.l.b16 %v261
    %v562 = vunpack.c.l.b16 %v262
    %v563 = vpack.c.b16 %v436, %v435
    %v564 = vpack.c.b16 %v438, %v437
    %v565 = vpack.c.b16 %v440, %v439
    %v566 = vpack.c.b16 %v442, %v441
    %v567 = vpack.c.b16 %v444, %v443
    %v568 = vpack.c.b16 %v446, %v445
    %v569 = vpack.c.b16 %v448, %v447
    %v570 = vpack.c.b16 %v450, %v449
    %v571 = vpack.c.b16 %v452, %v451
    %v572 = vpack.c.b16 %v454, %v453
    %v573 = vpack.c.b16 %v456, %v455
    %v574 = vpack.c.b16 %v458, %v457
    %v575 = vpack.c.b16 %v460, %v459
    %v576 = vpack.c.b16 %v462, %v461
    %v577 = vpack.c.b16 %v464, %v463
    %v578 = vpack.c.b16 %v466, %v465
    %v579 = vpack.c.b16 %v468, %v467
    %v580 = vpack.c.b16 %v470, %v469
    %v581 = vpack.c.b16 %v472, %v471
    %v582 = vpack.c.b16 %v474, %v473
    %v583 = vpack.c.b16 %v476, %v475
    %v584 = vpack.c.b16 %v478, %v477
    %v585 = vpack.c.b16 %v480, %v479
    %v586 = vpack.c.b16 %v482, %v481
    %v587 = vpack.c.b16 %v484, %v483
    %v588 = vpack.c.b16 %v486, %v485
    %v589 = vpack.c.b16 %v488, %v487
    %v590 = vpack.c.b16 %v490, %v489
    %v591 = vpack.c.b16 %v492, %v491
    %v592 = vpack.c.b16 %v494, %v493
    %v593 = vpack.c.b16 %v496, %v495
    %v594 = vpack.c.b16 %v498, %v497
    %v595 = vpack.c.b16 %v500, %v499
    %v596 = vpack.c.b16 %v502, %v501
    %v597 = vpack.c.b16 %v504, %v503
    %v598 = vpack.c.b16 %v506, %v505
    %v599 = vpack.c.b16 %v508, %v507
    %v600 = vpack.c.b16 %v510, %v509
    %v601 = vpack.c.b16 %v512, %v511
    %v602 = vpack.c.b16 %v514, %v513
    %v603 = vpack.c.b16 %v516, %v515
    %v604 = vpack.c.b16 %v518, %v517
    %v605 = vpack.c.b16 %v520, %v519
    %v606 = vpack.c.b16 %v522, %v521
    %v607 = vpack.c.b16 %v524, %v523
    %v608 = vpack.c.b16 %v526, %v525
    %v609 = vpack.c.b16 %v528, %v527
    %v610 = vpack.c.b16 %v530, %v529
    %v611 = vpack.c.b16 %v532, %v531
    %v612 = vpack.c.b16 %v534, %v533
    %v613 = vpack.c.b16 %v536, %v535
    %v614 = vpack.c.b16 %v538, %v537
    %v615 = vpack.c.b16 %v540, %v539
    %v616 = vpack.c.b16 %v542, %v541
    %v617 = vpack.c.b16 %v544, %v543
    %v618 = vpack.c.b16 %v546, %v545
    %v619 = vpack.c.b16 %v548, %v547
    %v620 = vpack.c.b16 %v550, %v549
    %v621 = vpack.c.b16 %v552, %v551
    %v622 = vpack.c.b16 %v554, %v553
    %v623 = vpack.c.b16 %v556, %v555
    %v624 = vpack.c.b16 %v558, %v557
    %v625 = vpack.c.b16 %v560, %v559
    %v626 = vpack.c.b16 %v562, %v561
    %691 = vmatpush.bf16.msra.mxu0 %v570
    %692 = vmatpush.bf16.msra.mxu0 %v569
    %693 = vmatpush.bf16.msra.mxu0 %v568
    %694 = vmatpush.bf16.msra.mxu0 %v567
    %695 = vmatpush.bf16.msra.mxu0 %v566
    %696 = vmatpush.bf16.msra.mxu0 %v565
    %697 = vmatpush.bf16.msra.mxu0 %v564
    %698 = vmatpush.bf16.msra.mxu0 %v563
    %699 = vmatmul.bf16.gmra.mxu0 %v291
    %v700 = vpop.f32.mrf.mxu0
    %v701 = vadd.f32 %v265, %v700
    %v702 = vpop.f32.mrf.mxu0
    %v703 = vadd.f32 %v265, %v702
    %704 = vdwg.mxu0
    %705 = vmatpush.bf16.msra.mxu0 %v578
    %706 = vmatpush.bf16.msra.mxu0 %v577
    %707 = vmatpush.bf16.msra.mxu0 %v576
    %708 = vmatpush.bf16.msra.mxu0 %v575
    %709 = vmatpush.bf16.msra.mxu0 %v574
    %710 = vmatpush.bf16.msra.mxu0 %v573
    %711 = vmatpush.bf16.msra.mxu0 %v572
    %712 = vmatpush.bf16.msra.mxu0 %v571
    %713 = vmatmul.bf16.gmra.mxu0 %v292
    %v714 = vpop.f32.mrf.mxu0
    %v715 = vadd.f32 %v701, %v714
    %v716 = vpop.f32.mrf.mxu0
    %v717 = vadd.f32 %v703, %v716
    %718 = vdwg.mxu0
    %719 = vmatpush.bf16.msra.mxu0 %v586
    %720 = vmatpush.bf16.msra.mxu0 %v585
    %721 = vmatpush.bf16.msra.mxu0 %v584
    %722 = vmatpush.bf16.msra.mxu0 %v583
    %723 = vmatpush.bf16.msra.mxu0 %v582
    %724 = vmatpush.bf16.msra.mxu0 %v581
    %725 = vmatpush.bf16.msra.mxu0 %v580
    %726 = vmatpush.bf16.msra.mxu0 %v579
    %727 = vmatmul.bf16.gmra.mxu0 %v293
    %v728 = vpop.f32.mrf.mxu0
    %v729 = vadd.f32 %v715, %v728
    %v730 = vpop.f32.mrf.mxu0
    %v731 = vadd.f32 %v717, %v730
    %732 = vdwg.mxu0
    %733 = vmatpush.bf16.msra.mxu0 %v594
    %734 = vmatpush.bf16.msra.mxu0 %v593
    %735 = vmatpush.bf16.msra.mxu0 %v592
    %736 = vmatpush.bf16.msra.mxu0 %v591
    %737 = vmatpush.bf16.msra.mxu0 %v590
    %738 = vmatpush.bf16.msra.mxu0 %v589
    %739 = vmatpush.bf16.msra.mxu0 %v588
    %740 = vmatpush.bf16.msra.mxu0 %v587
    %741 = vmatmul.bf16.gmra.mxu0 %v294
    %v742 = vpop.f32.mrf.mxu0
    %v743 = vadd.f32 %v729, %v742
    %v744 = vpop.f32.mrf.mxu0
    %v745 = vadd.f32 %v731, %v744
    %746 = vdwg.mxu0
    %747 = vmatpush.bf16.msra.mxu0 %v602
    %748 = vmatpush.bf16.msra.mxu0 %v601
    %749 = vmatpush.bf16.msra.mxu0 %v600
    %750 = vmatpush.bf16.msra.mxu0 %v599
    %751 = vmatpush.bf16.msra.mxu0 %v598
    %752 = vmatpush.bf16.msra.mxu0 %v597
    %753 = vmatpush.bf16.msra.mxu0 %v596
    %754 = vmatpush.bf16.msra.mxu0 %v595
    %755 = vmatmul.bf16.gmra.mxu0 %v295
    %v756 = vpop.f32.mrf.mxu0
    %v757 = vadd.f32 %v743, %v756
    %v758 = vpop.f32.mrf.mxu0
    %v759 = vadd.f32 %v745, %v758
    %760 = vdwg.mxu0
    %761 = vmatpush.bf16.msra.mxu0 %v610
    %762 = vmatpush.bf16.msra.mxu0 %v609
    %763 = vmatpush.bf16.msra.mxu0 %v608
    %764 = vmatpush.bf16.msra.mxu0 %v607
    %765 = vmatpush.bf16.msra.mxu0 %v606
    %766 = vmatpush.bf16.msra.mxu0 %v605
    %767 = vmatpush.bf16.msra.mxu0 %v604
    %768 = vmatpush.bf16.msra.mxu0 %v603
    %769 = vmatmul.bf16.gmra.mxu0 %v296
    %v770 = vpop.f32.mrf.mxu0
    %v771 = vadd.f32 %v757, %v770
    %v772 = vpop.f32.mrf.mxu0
    %v773 = vadd.f32 %v759, %v772
    %774 = vdwg.mxu0
    %775 = vmatpush.bf16.msra.mxu0 %v618
    %776 = vmatpush.bf16.msra.mxu0 %v617
    %777 = vmatpush.bf16.msra.mxu0 %v616
    %778 = vmatpush.bf16.msra.mxu0 %v615
    %779 = vmatpush.bf16.msra.mxu0 %v614
    %780 = vmatpush.bf16.msra.mxu0 %v613
    %781 = vmatpush.bf16.msra.mxu0 %v612
    %782 = vmatpush.bf16.msra.mxu0 %v611
    %783 = vmatmul.bf16.gmra.mxu0 %v297
    %v784 = vpop.f32.mrf.mxu0
    %v785 = vadd.f32 %v771, %v784
    %v786 = vpop.f32.mrf.mxu0
    %v787 = vadd.f32 %v773, %v786
    %788 = vdwg.mxu0
    %789 = vmatpush.bf16.msra.mxu0 %v626
    %790 = vmatpush.bf16.msra.mxu0 %v625
    %791 = vmatpush.bf16.msra.mxu0 %v624
    %792 = vmatpush.bf16.msra.mxu0 %v623
    %793 = vmatpush.bf16.msra.mxu0 %v622
    %794 = vmatpush.bf16.msra.mxu0 %v621
    %795 = vmatpush.bf16.msra.mxu0 %v620
    %796 = vmatpush.bf16.msra.mxu0 %v619
    %797 = vmatmul.bf16.gmra.mxu0 %v298
    %v798 = vpop.f32.mrf.mxu0
    %v799 = vadd.f32 %v785, %v798
    %v800 = vpop.f32.mrf.mxu0
    %v801 = vadd.f32 %v787, %v800
    %802 = vdwg.mxu0
    %v803 = vmul.f32 %v799, %v799
    %v804 = vmul.f32 %v801, %v801
    %v805 = vmul.f32 %v799, %v803
    %v806 = vmul.f32 %v801, %v804
    %v807 = vmul.f32 %v805, 0.044715
    %v808 = vmul.f32 %v806, 0.044715
    %v809 = vadd.f32 %v799, %v807
    %v810 = vadd.f32 %v801, %v808
    %v811 = vmul.f32 %v809, 0.7978846
    %v812 = vmul.f32 %v810, 0.7978846
    %v813 = vtanh.pop %v811
    %v814 = vtanh.pop %v812
    %v815 = vadd.f32 %v813, 1.0
    %v816 = vadd.f32 %v814, 1.0
    %v817 = vmul.f32 %v815, 0.5
    %v818 = vmul.f32 %v816, 0.5
    %v819 = vmul.f32 %v799, %v817
    %v820 = vmul.f32 %v801, %v818
    %v821 = vpack.c.bf16 %v820, %v819
    %v822 = vld [vmem:[#allocation8] sm:$0xf]
    %v823 = vld [vmem:[#allocation8 + $0x4] sm:$0xf]
    %v824 = vld [vmem:[#allocation8 + $0x8] sm:$0xf]
    %v825 = vld [vmem:[#allocation8 + $0xc] sm:$0xf]
    %v826 = vld [vmem:[#allocation8 + $0x10] sm:$0xf]
    %v827 = vld [vmem:[#allocation8 + $0x14] sm:$0xf]
    %v828 = vld [vmem:[#allocation8 + $0x18] sm:$0xf]
    %v829 = vld [vmem:[#allocation8 + $0x1c] sm:$0xf]
    %v830 = vld [vmem:[#allocation8 + $0x20] sm:$0xf]
    %v831 = vld [vmem:[#allocation8 + $0x24] sm:$0xf]
    %v832 = vld [vmem:[#allocation8 + $0x28] sm:$0xf]
    %v833 = vld [vmem:[#allocation8 + $0x2c] sm:$0xf]
    %v834 = vld [vmem:[#allocation8 + $0x30] sm:$0xf]
    %v835 = vld [vmem:[#allocation8 + $0x34] sm:$0xf]
    %v836 = vld [vmem:[#allocation8 + $0x38] sm:$0xf]
    %v837 = vld [vmem:[#allocation8 + $0x3c] sm:$0xf]
    %v838 = vld [vmem:[#allocation7] sm:$0xf]
    %v839 = vld [vmem:[#allocation7 + $0x4] sm:$0xf]
    %v840 = vld [vmem:[#allocation10] sm:$0xf]
    %v841 = vld [vmem:[#allocation10 + $0x4] sm:$0xf]
    %v842 = vld [vmem:[#allocation10 + $0x8] sm:$0xf]
    %v843 = vld [vmem:[#allocation10 + $0xc] sm:$0xf]
    %v844 = vld [vmem:[#allocation10 + $0x10] sm:$0xf]
    %v845 = vld [vmem:[#allocation10 + $0x14] sm:$0xf]
    %v846 = vld [vmem:[#allocation10 + $0x18] sm:$0xf]
    %v847 = vld [vmem:[#allocation10 + $0x1c] sm:$0xf]
    %v848 = vld [vmem:[#allocation10 + $0x20] sm:$0xf]
    %v849 = vld [vmem:[#allocation10 + $0x24] sm:$0xf]
    %v850 = vld [vmem:[#allocation10 + $0x28] sm:$0xf]
    %v851 = vld [vmem:[#allocation10 + $0x2c] sm:$0xf]
    %v852 = vld [vmem:[#allocation10 + $0x30] sm:$0xf]
    %v853 = vld [vmem:[#allocation10 + $0x34] sm:$0xf]
    %v854 = vld [vmem:[#allocation10 + $0x38] sm:$0xf]
    %v855 = vld [vmem:[#allocation10 + $0x3c] sm:$0xf]
    %v858 = vunpack.c.l.b16 %v838
    %v859 = vunpack.c.l.b16 %v839
    %v860 = vpack.c.b16 %v859, %v858
    %v878 = vunpack.c.l.b16 %v840
    %v879 = vunpack.c.l.b16 %v841
    %v880 = vunpack.c.l.b16 %v842
    %v881 = vunpack.c.l.b16 %v843
    %v882 = vunpack.c.l.b16 %v844
    %v883 = vunpack.c.l.b16 %v845
    %v884 = vunpack.c.l.b16 %v846
    %v885 = vunpack.c.l.b16 %v847
    %v886 = vunpack.c.l.b16 %v848
    %v887 = vunpack.c.l.b16 %v849
    %v888 = vunpack.c.l.b16 %v850
    %v889 = vunpack.c.l.b16 %v851
    %v890 = vunpack.c.l.b16 %v852
    %v891 = vunpack.c.l.b16 %v853
    %v892 = vunpack.c.l.b16 %v854
    %v893 = vunpack.c.l.b16 %v855
    %v894 = vpack.c.b16 %v879, %v878
    %v895 = vpack.c.b16 %v881, %v880
    %v896 = vpack.c.b16 %v883, %v882
    %v897 = vpack.c.b16 %v885, %v884
    %v898 = vpack.c.b16 %v887, %v886
    %v899 = vpack.c.b16 %v889, %v888
    %v900 = vpack.c.b16 %v891, %v890
    %v901 = vpack.c.b16 %v893, %v892
    %910 = vmatpush.bf16.msra.mxu0 %v901
    %911 = vmatpush.bf16.msra.mxu0 %v900
    %912 = vmatpush.bf16.msra.mxu0 %v899
    %913 = vmatpush.bf16.msra.mxu0 %v898
    %914 = vmatpush.bf16.msra.mxu0 %v897
    %915 = vmatpush.bf16.msra.mxu0 %v896
    %916 = vmatpush.bf16.msra.mxu0 %v895
    %917 = vmatpush.bf16.msra.mxu0 %v894
    %918 = vmatmul.bf16.gmra.mxu0 %v860
    %v919 = vpop.f32.mrf.mxu0
    %v920 = vadd.f32 0.0, %v919
    %v921 = vpop.f32.mrf.mxu0
    %v922 = vadd.f32 0.0, %v921
    %923 = vdwg.mxu0
    %v940 = vunpack.c.l.b16 %v822
    %v941 = vunpack.c.l.b16 %v823
    %v942 = vunpack.c.l.b16 %v824
    %v943 = vunpack.c.l.b16 %v825
    %v944 = vunpack.c.l.b16 %v826
    %v945 = vunpack.c.l.b16 %v827
    %v946 = vunpack.c.l.b16 %v828
    %v947 = vunpack.c.l.b16 %v829
    %v948 = vunpack.c.l.b16 %v830
    %v949 = vunpack.c.l.b16 %v831
    %v950 = vunpack.c.l.b16 %v832
    %v951 = vunpack.c.l.b16 %v833
    %v952 = vunpack.c.l.b16 %v834
    %v953 = vunpack.c.l.b16 %v835
    %v954 = vunpack.c.l.b16 %v836
    %v955 = vunpack.c.l.b16 %v837
    %v956 = vpack.c.b16 %v941, %v940
    %v957 = vpack.c.b16 %v943, %v942
    %v958 = vpack.c.b16 %v945, %v944
    %v959 = vpack.c.b16 %v947, %v946
    %v960 = vpack.c.b16 %v949, %v948
    %v961 = vpack.c.b16 %v951, %v950
    %v962 = vpack.c.b16 %v953, %v952
    %v963 = vpack.c.b16 %v955, %v954
    %972 = vmatpush.bf16.msra.mxu0 %v963
    %973 = vmatpush.bf16.msra.mxu0 %v962
    %974 = vmatpush.bf16.msra.mxu0 %v961
    %975 = vmatpush.bf16.msra.mxu0 %v960
    %976 = vmatpush.bf16.msra.mxu0 %v959
    %977 = vmatpush.bf16.msra.mxu0 %v958
    %978 = vmatpush.bf16.msra.mxu0 %v957
    %979 = vmatpush.bf16.msra.mxu0 %v956
    %980 = vmatmul.bf16.gmra.mxu0 %v821
    %v981 = vpop.f32.mrf.mxu0
    %v982 = vadd.f32 %v920, %v981
    %v983 = vpop.f32.mrf.mxu0
    %v984 = vadd.f32 %v922, %v983
    %985 = vdwg.mxu0
    %v986 = vld [vmem:[%s6] sm:$0x1]
    %v988 = vperm.slane %v986, 0
    %v990 = vadd.f32 %v982, %v988
    %v991 = vadd.f32 %v984, %v988
    %v992 = vmul.f32 %v990, 0.01
    %v993 = vmul.f32 %v991, 0.01
    %v994 = vmax.f32 %v990, %v992
    %v995 = vmax.f32 %v991, %v993
    %v996 = vpack.c.bf16 %v995, %v994
    %v997 = vld [vmem:[#allocation11] sm:$0xf]
    %v998 = vld [vmem:[#allocation11 + $0x4] sm:$0xf]
    %v999 = vld [vmem:[#allocation11 + $0x8] sm:$0xf]
    %v1000 = vld [vmem:[#allocation11 + $0xc] sm:$0xf]
    %v1001 = vld [vmem:[#allocation11 + $0x10] sm:$0xf]
    %v1002 = vld [vmem:[#allocation11 + $0x14] sm:$0xf]
    %v1003 = vld [vmem:[#allocation11 + $0x18] sm:$0xf]
    %v1004 = vld [vmem:[#allocation11 + $0x1c] sm:$0xf]
    %v1005 = vld [vmem:[#allocation11 + $0x20] sm:$0xf]
    %v1006 = vld [vmem:[#allocation11 + $0x24] sm:$0xf]
    %v1007 = vld [vmem:[#allocation11 + $0x28] sm:$0xf]
    %v1008 = vld [vmem:[#allocation11 + $0x2c] sm:$0xf]
    %v1009 = vld [vmem:[#allocation11 + $0x30] sm:$0xf]
    %v1010 = vld [vmem:[#allocation11 + $0x34] sm:$0xf]
    %v1011 = vld [vmem:[#allocation11 + $0x38] sm:$0xf]
    %v1012 = vld [vmem:[#allocation11 + $0x3c] sm:$0xf]
    %v1013 = vld [vmem:[%s8] sm:$0x1]
    %v1015 = vperm.slane %v1013, 0
    %v1033 = vunpack.c.l.b16 %v997
    %v1034 = vunpack.c.l.b16 %v998
    %v1035 = vunpack.c.l.b16 %v999
    %v1036 = vunpack.c.l.b16 %v1000
    %v1037 = vunpack.c.l.b16 %v1001
    %v1038 = vunpack.c.l.b16 %v1002
    %v1039 = vunpack.c.l.b16 %v1003
    %v1040 = vunpack.c.l.b16 %v1004
    %v1041 = vunpack.c.l.b16 %v1005
    %v1042 = vunpack.c.l.b16 %v1006
    %v1043 = vunpack.c.l.b16 %v1007
    %v1044 = vunpack.c.l.b16 %v1008
    %v1045 = vunpack.c.l.b16 %v1009
    %v1046 = vunpack.c.l.b16 %v1010
    %v1047 = vunpack.c.l.b16 %v1011
    %v1048 = vunpack.c.l.b16 %v1012
    %v1049 = vpack.c.b16 %v1034, %v1033
    %v1050 = vpack.c.b16 %v1036, %v1035
    %v1051 = vpack.c.b16 %v1038, %v1037
    %v1052 = vpack.c.b16 %v1040, %v1039
    %v1053 = vpack.c.b16 %v1042, %v1041
    %v1054 = vpack.c.b16 %v1044, %v1043
    %v1055 = vpack.c.b16 %v1046, %v1045
    %v1056 = vpack.c.b16 %v1048, %v1047
    %1065 = vmatpush.bf16.msra.mxu0 %v1056
    %1066 = vmatpush.bf16.msra.mxu0 %v1055
    %1067 = vmatpush.bf16.msra.mxu0 %v1054
    %1068 = vmatpush.bf16.msra.mxu0 %v1053
    %1069 = vmatpush.bf16.msra.mxu0 %v1052
    %1070 = vmatpush.bf16.msra.mxu0 %v1051
    %1071 = vmatpush.bf16.msra.mxu0 %v1050
    %1072 = vmatpush.bf16.msra.mxu0 %v1049
    %1073 = vmatmul.bf16.gmra.mxu0 %v996
    %v1074 = vpop.f32.mrf.mxu0
    %v1075 = vadd.f32 %v1015, %v1074
    %v1076 = vpop.f32.mrf.mxu0
    %v1077 = vadd.f32 %v1015, %v1076
    %1078 = vdwg.mxu0
    %1079 = vst [vmem:[#allocation13] sm:$0xff] %v1075
    %1080 = vst [vmem:[#allocation13 + $0x8] sm:$0xff] %v1077
    // Predicated region
    $region62: #{tpu_custom_call.1} parent=1 // pred_check
      _
    $region63: #{tpu_custom_call.1} parent=1 // pred_check_branch
      %1082 = sbr.rel (0) target = $region65
    $region64: #{tpu_custom_call.1} parent=1 // pred_region
      %1084 = vsyncadd [#allocation4], 0
      %s1085 = sshll.u32 [#allocation13], 4
      %s1086 = int_to_ptr.vmem [resolvable:$true] %s1085
      %s1087 = sshll.u32 %s9, 4
      %s1088 = int_to_ptr.hbm [resolvable:$true] %s1087
      %1093 = dma.vmem_to_hbm [thread:$0]  %s1086, 256, %s1088, [#allocation4], 128, 128, 8
    $region65: #{tpu_custom_call.1} parent=1 // pred_fallthru
      _
    // Predicated region
    $region66: #{tpu_custom_call.1} parent=1 // pred_check
      _
    $region67: #{tpu_custom_call.1} parent=1 // pred_check_branch
      %1095 = sbr.rel (0) target = $region69
    $region68: #{tpu_custom_call.1} parent=1 // pred_region
      %1097 = dma.done [#allocation4], 256
    $region69: #{tpu_custom_call.1} parent=1 // pred_fallthru
      _
    %1098 = vsyncpa [#allocation3], 1
    %1099 = vsyncpa [#allocation6], 1
    %1100 = vsyncpa [#allocation9], 1
    %1101 = vsyncpa [#allocation12], 1
    %1102 = vsyncpa [#allocation4], 1

</llo_original>
